<compile_context>
chip_gen: v5e
topology: v5e:2x2
jax: 0.10.0
libtpu: 0.0.40
codegen_flags: <defaults>
</compile_context>

<pallas_src>
import functools
import math

import jax
import jax.numpy as jnp
from jax.experimental import pallas as pl
from jax.experimental.pallas import tpu as pltpu

LN_EPS = 1e-5      # nn.LayerNorm / TransformerEncoderLayer default
NORM_EPS = 1e-12   # F.normalize default eps


def _round_up(x, m):
    return (x + m - 1) // m * m


def _layernorm(h, g, b):
    # two-pass (x - mu)^2 form: immune to catastrophic cancellation
    mu = jnp.mean(h, axis=-1, keepdims=True)
    d = h - mu
    var = jnp.mean(d * d, axis=-1, keepdims=True)
    return d * jax.lax.rsqrt(var + LN_EPS) * g + b


def _gelu(h):
    # exact erf GELU == torch F.gelu(approximate='none') / nn.GELU()
    return 0.5 * h * (1.0 + jax.lax.erf(h * (1.0 / math.sqrt(2.0))))


def _dot_bf16(a_f32, w_bf16):
    # bf16 MXU inputs, f32 accumulation
    return jnp.dot(a_f32.astype(jnp.bfloat16), w_bf16,
                   preferred_element_type=jnp.float32)


def _transformer_projection_kernel(
    x_ref, cvec_ref,
    wa_ref, w1_ref, w2_ref, lve_ref, lvh_ref,
    wp1_ref, wp2_ref,
    out_ref,
    h_ref,
    *, resident,
):
    layer = pl.program_id(1)
    last = pl.num_programs(1) - 1
    # resident mode: all layer weights live in VMEM, index dynamically by layer.
    # streaming mode: one layer's weights per grid step, index statically at 0.
    li = layer if resident else 0

    # ---- layer 0: (re)initialize the carried activation with self.norm(x)
    @pl.when(layer == 0)
    def _():
        x = x_ref[...].astype(jnp.float32)
        h_ref[...] = _layernorm(x, cvec_ref[0:1], cvec_ref[1:2])

    h = h_ref[...]

    vecs = lve_ref[li]            # (6, E): b_attn, ln1_g, ln1_b, b2, ln2_g, ln2_b
    b1 = lvh_ref[li]              # (1, H)

    # ---- self-attention (seq_len == 1 -> softmax == 1, Q/K cancel):
    #      attn = h @ (Wv @ Wo) + (bv @ Wo + bo); the fold is done in the wrapper.
    attn = _dot_bf16(h, wa_ref[li]) + vecs[0:1]
    # TODO(synk): dropout layers are identity in eval mode (no RNG/training path implemented).
    h = _layernorm(h + attn, vecs[1:2], vecs[2:3])

    # ---- feed-forward (GELU)
    ff_hidden = _gelu(_dot_bf16(h, w1_ref[li]) + b1)
    ff = _dot_bf16(ff_hidden, w2_ref[li]) + vecs[3:4]
    h = _layernorm(h + ff, vecs[4:5], vecs[5:6])
    h_ref[...] = h

    # ---- after the last encoder layer: projection head + L2 normalize (EUP rsqrt)
    @pl.when(layer == last)
    def _():
        p_hidden = _gelu(_dot_bf16(h, wp1_ref[...]) + cvec_ref[2:3])
        p = _dot_bf16(p_hidden, wp2_ref[...]) + cvec_ref[3:4]
        sumsq = jnp.sum(p * p, axis=-1, keepdims=True)
        inv = jax.lax.rsqrt(jnp.maximum(sumsq, NORM_EPS * NORM_EPS))
        out_ref[...] = (p * inv).astype(out_ref.dtype)


def make_params(key, embed_dim, hidden_dim, num_layers):
    """PyTorch-equivalent parameters (f32). Linear weights stored as (in, out)."""
    ks = iter(jax.random.split(key, 64))

    def w(shape, scale=0.02):
        return jax.random.normal(next(ks), shape, jnp.float32) * scale

    return dict(
        ln0_g=jnp.ones((1, embed_dim), jnp.float32),
        ln0_b=jnp.zeros((1, embed_dim), jnp.float32),
        # per-layer attention (only V / out_proj matter for seq_len == 1)
        wv=w((num_layers, embed_dim, embed_dim)),
        bv=w((num_layers, 1, embed_dim), 0.01),
        wo=w((num_layers, embed_dim, embed_dim)),
        bo=w((num_layers, 1, embed_dim), 0.01),
        ln1_g=jnp.ones((num_layers, 1, embed_dim), jnp.float32),
        ln1_b=jnp.zeros((num_layers, 1, embed_dim), jnp.float32),
        w1=w((num_layers, embed_dim, hidden_dim)),
        b1=w((num_layers, 1, hidden_dim), 0.01),
        w2=w((num_layers, hidden_dim, embed_dim)),
        b2=w((num_layers, 1, embed_dim), 0.01),
        ln2_g=jnp.ones((num_layers, 1, embed_dim), jnp.float32),
        ln2_b=jnp.zeros((num_layers, 1, embed_dim), jnp.float32),
        # projection head
        wp1=w((embed_dim, embed_dim)),
        bp1=w((1, embed_dim), 0.01),
        wp2=w((embed_dim, embed_dim)),
        bp2=w((1, embed_dim), 0.01),
    )


def fold_params(params):
    """Fold V/out_proj into one matrix (exact, f32), consolidate small vectors, cast to bf16."""
    w_attn = jnp.einsum("lij,ljk->lik", params["wv"], params["wo"])
    b_attn = jnp.einsum("lij,ljk->lik", params["bv"], params["wo"]) + params["bo"]
    bf16 = lambda a: a.astype(jnp.bfloat16)
    # per-layer E-dim vectors consolidated into one streamed array (fewer DMA descriptors)
    layer_vecs_e = jnp.concatenate(
        [b_attn, params["ln1_g"], params["ln1_b"],
         params["b2"], params["ln2_g"], params["ln2_b"]], axis=1)          # (L, 6, E)
    layer_vecs_h = params["b1"]                                            # (L, 1, H)
    consts_vec = jnp.concatenate(
        [params["ln0_g"], params["ln0_b"], params["bp1"], params["bp2"]], axis=0)  # (4, E)
    return dict(
        consts_vec=consts_vec,
        w_attn=bf16(w_attn), w1=bf16(params["w1"]), w2=bf16(params["w2"]),
        layer_vecs_e=layer_vecs_e, layer_vecs_h=layer_vecs_h,
        wp1=bf16(params["wp1"]), wp2=bf16(params["wp2"]),
    )


def _vmem_capacity_bytes():
    try:
        return int(pltpu.get_tpu_info().vmem_capacity_bytes)
    except Exception:
        return 64 * 1024 * 1024   # conservative (v7x per-TC)


@functools.partial(jax.jit, static_argnames=("num_layers", "block_b", "force_streaming"))
def transformer_projection(x, folded, num_layers, block_b=256, force_streaming=False):
    b, e = x.shape
    h = folded["w1"].shape[-1]
    L = num_layers

    budget = _vmem_capacity_bytes() * 3 // 4   # leave headroom for compiler scratch

    def vmem_req(tb, resident):
        # per-BlockSpec VMEM, assuming default double-buffering on every spec (conservative)
        w_layer = (e * e + 2 * e * h) * 2 + (6 * e + h) * 4       # one layer's streamed blocks
        layer_copies = 2 * L if resident else 2
        weights = layer_copies * w_layer
        consts = 2 * (4 * e * 4 + 2 * e * e * 2)                  # consts_vec + wp1 + wp2
        io = 4 * tb * e * 4                                       # x + out tiles
        scratch = tb * e * 4                                      # carried activation h
        working = tb * (2 * e + h) * 4                            # in-flight intermediates
        return weights + consts + io + scratch + working

    # ---- batch tile: as large as the budget allows (review: tb=128 is weight-DMA bound)
    tb = min(block_b, _round_up(b, 8))

    # ---- resident-weights path when everything fits (v5e/v6e 128 MiB; small models on v7x)
    resident = (not force_streaming) and vmem_req(tb, True) <= budget
    if resident and b >= 16 and _round_up(b, tb) // tb < 2:
        # give the second v7x TensorCore a batch tile; free in resident mode (no re-streaming)
        tb = max(8, _round_up(_round_up(b, 16) // 2, 8))
        resident = vmem_req(tb, True) <= budget
    if not resident:
        # streaming fallback: shrink the batch tile until the working set fits the budget
        while tb > 8 and vmem_req(tb, False) > budget:
            tb = max(8, _round_up(tb // 2, 8))
    # TODO(synk): if even tb=8 streaming exceeds the budget (very large e/h), the FFN
    # weights would additionally need a hidden-dim (K) tiling axis.

    required = vmem_req(tb, resident)
    vmem_limit = int(min(budget, max(required * 6 // 5 + (2 << 20), 16 << 20)))

    b_pad = _round_up(b, tb)
    if b_pad != b:
        x = jnp.pad(x, ((0, b_pad - b), (0, 0)))
    grid = (b_pad // tb, L)

    lw = L if resident else 1
    lmap = (lambda i, l: (0, 0, 0)) if resident else (lambda i, l: (l, 0, 0))
    cmap2 = lambda i, l: (0, 0)

    in_specs = [
        pl.BlockSpec((tb, e), lambda i, l: (i, 0)),   # x
        pl.BlockSpec((4, e), cmap2),                  # consts_vec: ln0_g, ln0_b, bp1, bp2
        pl.BlockSpec((lw, e, e), lmap),               # w_attn (bf16)
        pl.BlockSpec((lw, e, h), lmap),               # w1 (bf16)
        pl.BlockSpec((lw, h, e), lmap),               # w2 (bf16)
        pl.BlockSpec((lw, 6, e), lmap),               # per-layer E-dim vectors
        pl.BlockSpec((lw, 1, h), lmap),               # per-layer b1
        pl.BlockSpec((e, e), cmap2),                  # wp1 (bf16)
        pl.BlockSpec((e, e), cmap2),                  # wp2 (bf16)
    ]
    out_specs = pl.BlockSpec((tb, e), lambda i, l: (i, 0))

    w_layer_bytes = (e * e + 2 * e * h) * 2 + (6 * e + h) * 4
    const_bytes = 2 * e * e * 2 + 4 * e * 4
    n_tiles = b_pad // tb
    weight_fetches = (1 if resident else n_tiles) * L * w_layer_bytes

    flops = 2 * b_pad * (L * (e * e + 2 * e * h) + 2 * e * e)
    transcendentals = b_pad * (L * h + e)
    bytes_accessed = weight_fetches + const_bytes + 2 * 4 * b_pad * e

    kernel = functools.partial(_transformer_projection_kernel, resident=resident)

    out = pl.pallas_call(
        kernel,
        out_shape=jax.ShapeDtypeStruct((b_pad, e), jnp.float32),
        grid_spec=pltpu.PrefetchScalarGridSpec(
            num_scalar_prefetch=0,
            grid=grid,
            in_specs=in_specs,
            out_specs=out_specs,
            scratch_shapes=[pltpu.VMEM((tb, e), jnp.float32)],   # carried activation h
        ),
        compiler_params=pltpu.CompilerParams(
            dimension_semantics=("parallel", "arbitrary"),
            vmem_limit_bytes=vmem_limit,
        ),
        cost_estimate=pl.CostEstimate(
            flops=int(flops),
            transcendentals=int(transcendentals),
            bytes_accessed=int(bytes_accessed),
        ),
    )(
        x,
        folded["consts_vec"],
        folded["w_attn"], folded["w1"], folded["w2"],
        folded["layer_vecs_e"], folded["layer_vecs_h"],
        folded["wp1"], folded["wp2"],
    )
    return out[:b]


def reference(x, params, num_layers):
    """Pure-JAX f32 reference mirroring the PyTorch module (eval mode)."""
    h = _layernorm(x, params["ln0_g"], params["ln0_b"])
    for l in range(num_layers):
        v = h @ params["wv"][l] + params["bv"][l]
        attn = v @ params["wo"][l] + params["bo"][l]
        h = _layernorm(h + attn, params["ln1_g"][l], params["ln1_b"][l])
        ff = _gelu(h @ params["w1"][l] + params["b1"][l]) @ params["w2"][l] + params["b2"][l]
        h = _layernorm(h + ff, params["ln2_g"][l], params["ln2_b"][l])
    p = _gelu(h @ params["wp1"] + params["bp1"]) @ params["wp2"] + params["bp2"]
    norm = jnp.sqrt(jnp.sum(p * p, axis=-1, keepdims=True))
    return p / jnp.maximum(norm, NORM_EPS)


if __name__ == "__main__":
    # small, module-consistent shapes
    batch = 2
    embed_dim = 32
    hidden_dim = 64
    num_layers = 2
    # num_heads = 4  -> numerically irrelevant for seq_len == 1 (must divide embed_dim)
    # NOTE: small embed dims (< 128 lanes) are layout-inefficient on TPU; production
    # CLIP-sized shapes (e=768, h=3072) are lane-dense and hit the fast paths here.

    key = jax.random.PRNGKey(0)
    kx, kp = jax.random.split(key)
    x = jax.random.normal(kx, (batch, embed_dim), jnp.float32)
    params = make_params(kp, embed_dim, hidden_dim, num_layers)
    folded = fold_params(params)

    ref = reference(x, params, num_layers)

    # default path (resident weights if they fit the VMEM budget)
    out = transformer_projection(x, folded, num_layers=num_layers)
    out = jax.block_until_ready(out)
    assert out.shape == (batch, embed_dim)
    row_norms = jnp.linalg.norm(out, axis=1)
    assert jnp.allclose(row_norms, 1.0, atol=1e-4), row_norms
    max_err = float(jnp.max(jnp.abs(out - ref)))
    assert max_err < 3e-2, max_err

    # per-layer streaming fallback path (exercised explicitly for coverage)
    out_s = transformer_projection(x, folded, num_layers=num_layers, force_streaming=True)
    out_s = jax.block_until_ready(out_s)
    max_err_s = float(jnp.max(jnp.abs(out_s - ref)))
    assert max_err_s < 3e-2, max_err_s

    print("KERNEL_OK")
</pallas_src>

<mosaic_0001>
module attributes {stable_mosaic.version = 11 : i64} {
  func.func @_transformer_projection_kernel(%arg0: i32, %arg1: i32, %arg2: memref<8x32xf32, #tpu.memory_space<vmem>>, %arg3: memref<4x32xf32, #tpu.memory_space<vmem>>, %arg4: memref<2x32x32xbf16, #tpu.memory_space<vmem>>, %arg5: memref<2x32x64xbf16, #tpu.memory_space<vmem>>, %arg6: memref<2x64x32xbf16, #tpu.memory_space<vmem>>, %arg7: memref<2x6x32xf32, #tpu.memory_space<vmem>>, %arg8: memref<2x1x64xf32, #tpu.memory_space<vmem>>, %arg9: memref<32x32xbf16, #tpu.memory_space<vmem>>, %arg10: memref<32x32xbf16, #tpu.memory_space<vmem>>, %arg11: memref<8x32xf32, #tpu.memory_space<vmem>>, %arg12: memref<8x32xf32, #tpu.memory_space<vmem>>) attributes {dimension_semantics = [#tpu.dimension_semantics<parallel>, #tpu.dimension_semantics<arbitrary>], iteration_bounds = array<i64: 1, 2>, scalar_prefetch = 0 : i64, scratch_operands = 1 : i64, tpu.core_type = #tpu.core_type<tc>, window_params = [{transform_indices = @transform_0, window_bounds = array<i64: 8, 32>}, {pipeline_mode = #tpu.pipeline_mode<synchronous>, transform_indices = @transform_1, window_bounds = array<i64: 4, 32>}, {pipeline_mode = #tpu.pipeline_mode<synchronous>, transform_indices = @transform_2, window_bounds = array<i64: 2, 32, 32>}, {pipeline_mode = #tpu.pipeline_mode<synchronous>, transform_indices = @transform_3, window_bounds = array<i64: 2, 32, 64>}, {pipeline_mode = #tpu.pipeline_mode<synchronous>, transform_indices = @transform_4, window_bounds = array<i64: 2, 64, 32>}, {pipeline_mode = #tpu.pipeline_mode<synchronous>, transform_indices = @transform_5, window_bounds = array<i64: 2, 6, 32>}, {pipeline_mode = #tpu.pipeline_mode<synchronous>, transform_indices = @transform_6, window_bounds = array<i64: 2, 1, 64>}, {pipeline_mode = #tpu.pipeline_mode<synchronous>, transform_indices = @transform_7, window_bounds = array<i64: 32, 32>}, {pipeline_mode = #tpu.pipeline_mode<synchronous>, transform_indices = @transform_8, window_bounds = array<i64: 32, 32>}, {transform_indices = @transform_9, window_bounds = array<i64: 8, 32>}]} {
    %c0_i32 = arith.constant 0 : i32
    %0 = arith.cmpi eq, %arg1, %c0_i32 : i32
    %1 = arith.extui %0 : i1 to i32
    %c0_i32_0 = arith.constant 0 : i32
    %2 = arith.cmpi ne, %1, %c0_i32_0 : i32
    scf.if %2 {
      %c0_30 = arith.constant 0 : index
      %c0_31 = arith.constant 0 : index
      %91 = vector.load %arg2[%c0_30, %c0_31] : memref<8x32xf32, #tpu.memory_space<vmem>>, vector<8x32xf32>
      %c0_32 = arith.constant 0 : index
      %c0_33 = arith.constant 0 : index
      %92 = vector.load %arg3[%c0_32, %c0_33] : memref<4x32xf32, #tpu.memory_space<vmem>>, vector<1x32xf32>
      %c1 = arith.constant 1 : index
      %c0_34 = arith.constant 0 : index
      %93 = vector.load %arg3[%c1, %c0_34] : memref<4x32xf32, #tpu.memory_space<vmem>>, vector<1x32xf32>
      %cst_35 = arith.constant dense<0.000000e+00> : vector<8xf32>
      %94 = vector.multi_reduction <add>, %91, %cst_35 [1] : vector<8x32xf32> to vector<8xf32>
      %95 = vector.shape_cast %94 : vector<8xf32> to vector<8x1xf32>
      %cst_36 = arith.constant 3.200000e+01 : f32
      %96 = vector.broadcast %cst_36 : f32 to vector<8x1xf32>
      %97 = arith.divf %95, %96 : vector<8x1xf32>
      %98 = vector.broadcast %97 : vector<8x1xf32> to vector<8x32xf32>
      %99 = arith.subf %91, %98 : vector<8x32xf32>
      %100 = arith.mulf %99, %99 : vector<8x32xf32>
      %cst_37 = arith.constant dense<0.000000e+00> : vector<8xf32>
      %101 = vector.multi_reduction <add>, %100, %cst_37 [1] : vector<8x32xf32> to vector<8xf32>
      %102 = vector.shape_cast %101 : vector<8xf32> to vector<8x1xf32>
      %cst_38 = arith.constant 3.200000e+01 : f32
      %103 = vector.broadcast %cst_38 : f32 to vector<8x1xf32>
      %104 = arith.divf %102, %103 : vector<8x1xf32>
      %cst_39 = arith.constant 9.99999974E-6 : f32
      %105 = vector.broadcast %cst_39 : f32 to vector<8x1xf32>
      %106 = arith.addf %104, %105 : vector<8x1xf32>
      %107 = math.rsqrt %106 : vector<8x1xf32>
      %108 = vector.broadcast %107 : vector<8x1xf32> to vector<8x32xf32>
      %109 = arith.mulf %99, %108 : vector<8x32xf32>
      %110 = vector.broadcast %92 : vector<1x32xf32> to vector<8x32xf32>
      %111 = arith.mulf %109, %110 : vector<8x32xf32>
      %112 = vector.broadcast %93 : vector<1x32xf32> to vector<8x32xf32>
      %113 = arith.addf %111, %112 : vector<8x32xf32>
      %c0_40 = arith.constant 0 : index
      %c0_41 = arith.constant 0 : index
      %114 = vector.load %arg12[%c0_40, %c0_41] : memref<8x32xf32, #tpu.memory_space<vmem>>, vector<8x32xf32>
      tpu.vector_store %arg12[%c0_40, %c0_41], %113 {strides = array<i32>} : memref<8x32xf32, #tpu.memory_space<vmem>>, vector<8x32xf32>,
    } else {
    }
    %c0 = arith.constant 0 : index
    %c0_1 = arith.constant 0 : index
    %3 = vector.load %arg12[%c0, %c0_1] : memref<8x32xf32, #tpu.memory_space<vmem>>, vector<8x32xf32>
    %4 = arith.index_cast %arg1 : i32 to index
    %c0_2 = arith.constant 0 : index
    %c0_3 = arith.constant 0 : index
    %5 = vector.load %arg7[%4, %c0_2, %c0_3] : memref<2x6x32xf32, #tpu.memory_space<vmem>>, vector<1x6x32xf32>
    %6 = vector.shape_cast %5 : vector<1x6x32xf32> to vector<6x32xf32>
    %7 = arith.index_cast %arg1 : i32 to index
    %c0_4 = arith.constant 0 : index
    %c0_5 = arith.constant 0 : index
    %8 = vector.load %arg8[%7, %c0_4, %c0_5] : memref<2x1x64xf32, #tpu.memory_space<vmem>>, vector<1x1x64xf32>
    %9 = vector.shape_cast %8 : vector<1x1x64xf32> to vector<1x64xf32>
    %10 = arith.index_cast %arg1 : i32 to index
    %c0_6 = arith.constant 0 : index
    %c0_7 = arith.constant 0 : index
    %11 = vector.load %arg4[%10, %c0_6, %c0_7] : memref<2x32x32xbf16, #tpu.memory_space<vmem>>, vector<1x32x32xbf16>
    %12 = vector.shape_cast %11 : vector<1x32x32xbf16> to vector<32x32xbf16>
    %13 = arith.truncf %3 : vector<8x32xf32> to vector<8x32xbf16>
    %cst = arith.constant dense<0.000000e+00> : vector<8x32xf32>
    %14 = tpu.matmul %13, %12, %cst {dimension_numbers = #tpu.dot_dimension_numbers<[1], [0], [0], [1], [0, 0, 1, 1], [], []>} : vector<8x32xbf16>, vector<32x32xbf16>, vector<8x32xf32> -> vector<8x32xf32>
    %15 = vector.extract_strided_slice %6 {offsets = [0, 0], sizes = [1, 32], strides = [1, 1]} : vector<6x32xf32> to vector<1x32xf32>
    %16 = vector.broadcast %15 : vector<1x32xf32> to vector<8x32xf32>
    %17 = arith.addf %14, %16 : vector<8x32xf32>
    %18 = arith.addf %3, %17 : vector<8x32xf32>
    %19 = vector.extract_strided_slice %6 {offsets = [1, 0], sizes = [1, 32], strides = [1, 1]} : vector<6x32xf32> to vector<1x32xf32>
    %20 = vector.extract_strided_slice %6 {offsets = [2, 0], sizes = [1, 32], strides = [1, 1]} : vector<6x32xf32> to vector<1x32xf32>
    %cst_8 = arith.constant dense<0.000000e+00> : vector<8xf32>
    %21 = vector.multi_reduction <add>, %18, %cst_8 [1] : vector<8x32xf32> to vector<8xf32>
    %22 = vector.shape_cast %21 : vector<8xf32> to vector<8x1xf32>
    %cst_9 = arith.constant 3.200000e+01 : f32
    %23 = vector.broadcast %cst_9 : f32 to vector<8x1xf32>
    %24 = arith.divf %22, %23 : vector<8x1xf32>
    %25 = vector.broadcast %24 : vector<8x1xf32> to vector<8x32xf32>
    %26 = arith.subf %18, %25 : vector<8x32xf32>
    %27 = arith.mulf %26, %26 : vector<8x32xf32>
    %cst_10 = arith.constant dense<0.000000e+00> : vector<8xf32>
    %28 = vector.multi_reduction <add>, %27, %cst_10 [1] : vector<8x32xf32> to vector<8xf32>
    %29 = vector.shape_cast %28 : vector<8xf32> to vector<8x1xf32>
    %cst_11 = arith.constant 3.200000e+01 : f32
    %30 = vector.broadcast %cst_11 : f32 to vector<8x1xf32>
    %31 = arith.divf %29, %30 : vector<8x1xf32>
    %cst_12 = arith.constant 9.99999974E-6 : f32
    %32 = vector.broadcast %cst_12 : f32 to vector<8x1xf32>
    %33 = arith.addf %31, %32 : vector<8x1xf32>
    %34 = math.rsqrt %33 : vector<8x1xf32>
    %35 = vector.broadcast %34 : vector<8x1xf32> to vector<8x32xf32>
    %36 = arith.mulf %26, %35 : vector<8x32xf32>
    %37 = vector.broadcast %19 : vector<1x32xf32> to vector<8x32xf32>
    %38 = arith.mulf %36, %37 : vector<8x32xf32>
    %39 = vector.broadcast %20 : vector<1x32xf32> to vector<8x32xf32>
    %40 = arith.addf %38, %39 : vector<8x32xf32>
    %41 = arith.index_cast %arg1 : i32 to index
    %c0_13 = arith.constant 0 : index
    %c0_14 = arith.constant 0 : index
    %42 = vector.load %arg5[%41, %c0_13, %c0_14] : memref<2x32x64xbf16, #tpu.memory_space<vmem>>, vector<1x32x64xbf16>
    %43 = vector.shape_cast %42 : vector<1x32x64xbf16> to vector<32x64xbf16>
    %44 = arith.truncf %40 : vector<8x32xf32> to vector<8x32xbf16>
    %cst_15 = arith.constant dense<0.000000e+00> : vector<8x64xf32>
    %45 = tpu.matmul %44, %43, %cst_15 {dimension_numbers = #tpu.dot_dimension_numbers<[1], [0], [0], [1], [0, 0, 1, 1], [], []>} : vector<8x32xbf16>, vector<32x64xbf16>, vector<8x64xf32> -> vector<8x64xf32>
    %46 = vector.broadcast %9 : vector<1x64xf32> to vector<8x64xf32>
    %47 = arith.addf %45, %46 : vector<8x64xf32>
    %cst_16 = arith.constant 5.000000e-01 : f32
    %48 = vector.broadcast %cst_16 : f32 to vector<8x64xf32>
    %49 = arith.mulf %48, %47 : vector<8x64xf32>
    %cst_17 = arith.constant 0.707106769 : f32
    %50 = vector.broadcast %cst_17 : f32 to vector<8x64xf32>
    %51 = arith.mulf %47, %50 : vector<8x64xf32>
    %52 = math.erf %51 : vector<8x64xf32>
    %cst_18 = arith.constant 1.000000e+00 : f32
    %53 = vector.broadcast %cst_18 : f32 to vector<8x64xf32>
    %54 = arith.addf %53, %52 : vector<8x64xf32>
    %55 = arith.mulf %49, %54 : vector<8x64xf32>
    %56 = arith.index_cast %arg1 : i32 to index
    %c0_19 = arith.constant 0 : index
    %c0_20 = arith.constant 0 : index
    %57 = vector.load %arg6[%56, %c0_19, %c0_20] : memref<2x64x32xbf16, #tpu.memory_space<vmem>>, vector<1x64x32xbf16>
    %58 = vector.shape_cast %57 : vector<1x64x32xbf16> to vector<64x32xbf16>
    %59 = arith.truncf %55 : vector<8x64xf32> to vector<8x64xbf16>
    %cst_21 = arith.constant dense<0.000000e+00> : vector<8x32xf32>
    %60 = tpu.matmul %59, %58, %cst_21 {dimension_numbers = #tpu.dot_dimension_numbers<[1], [0], [0], [1], [0, 0, 1, 1], [], []>} : vector<8x64xbf16>, vector<64x32xbf16>, vector<8x32xf32> -> vector<8x32xf32>
    %61 = vector.extract_strided_slice %6 {offsets = [3, 0], sizes = [1, 32], strides = [1, 1]} : vector<6x32xf32> to vector<1x32xf32>
    %62 = vector.broadcast %61 : vector<1x32xf32> to vector<8x32xf32>
    %63 = arith.addf %60, %62 : vector<8x32xf32>
    %64 = arith.addf %40, %63 : vector<8x32xf32>
    %65 = vector.extract_strided_slice %6 {offsets = [4, 0], sizes = [1, 32], strides = [1, 1]} : vector<6x32xf32> to vector<1x32xf32>
    %66 = vector.extract_strided_slice %6 {offsets = [5, 0], sizes = [1, 32], strides = [1, 1]} : vector<6x32xf32> to vector<1x32xf32>
    %cst_22 = arith.constant dense<0.000000e+00> : vector<8xf32>
    %67 = vector.multi_reduction <add>, %64, %cst_22 [1] : vector<8x32xf32> to vector<8xf32>
    %68 = vector.shape_cast %67 : vector<8xf32> to vector<8x1xf32>
    %cst_23 = arith.constant 3.200000e+01 : f32
    %69 = vector.broadcast %cst_23 : f32 to vector<8x1xf32>
    %70 = arith.divf %68, %69 : vector<8x1xf32>
    %71 = vector.broadcast %70 : vector<8x1xf32> to vector<8x32xf32>
    %72 = arith.subf %64, %71 : vector<8x32xf32>
    %73 = arith.mulf %72, %72 : vector<8x32xf32>
    %cst_24 = arith.constant dense<0.000000e+00> : vector<8xf32>
    %74 = vector.multi_reduction <add>, %73, %cst_24 [1] : vector<8x32xf32> to vector<8xf32>
    %75 = vector.shape_cast %74 : vector<8xf32> to vector<8x1xf32>
    %cst_25 = arith.constant 3.200000e+01 : f32
    %76 = vector.broadcast %cst_25 : f32 to vector<8x1xf32>
    %77 = arith.divf %75, %76 : vector<8x1xf32>
    %cst_26 = arith.constant 9.99999974E-6 : f32
    %78 = vector.broadcast %cst_26 : f32 to vector<8x1xf32>
    %79 = arith.addf %77, %78 : vector<8x1xf32>
    %80 = math.rsqrt %79 : vector<8x1xf32>
    %81 = vector.broadcast %80 : vector<8x1xf32> to vector<8x32xf32>
    %82 = arith.mulf %72, %81 : vector<8x32xf32>
    %83 = vector.broadcast %65 : vector<1x32xf32> to vector<8x32xf32>
    %84 = arith.mulf %82, %83 : vector<8x32xf32>
    %85 = vector.broadcast %66 : vector<1x32xf32> to vector<8x32xf32>
    %86 = arith.addf %84, %85 : vector<8x32xf32>
    %c0_27 = arith.constant 0 : index
    %c0_28 = arith.constant 0 : index
    %87 = vector.load %arg12[%c0_27, %c0_28] : memref<8x32xf32, #tpu.memory_space<vmem>>, vector<8x32xf32>
    tpu.vector_store %arg12[%c0_27, %c0_28], %86 {strides = array<i32>} : memref<8x32xf32, #tpu.memory_space<vmem>>, vector<8x32xf32>,
    %c1_i32 = arith.constant 1 : i32
    %88 = arith.cmpi eq, %arg1, %c1_i32 : i32
    %89 = arith.extui %88 : i1 to i32
    %c0_i32_29 = arith.constant 0 : i32
    %90 = arith.cmpi ne, %89, %c0_i32_29 : i32
    scf.if %90 {
      %c0_30 = arith.constant 0 : index
      %c0_31 = arith.constant 0 : index
      %91 = vector.load %arg9[%c0_30, %c0_31] : memref<32x32xbf16, #tpu.memory_space<vmem>>, vector<32x32xbf16>
      %92 = arith.truncf %86 : vector<8x32xf32> to vector<8x32xbf16>
      %cst_32 = arith.constant dense<0.000000e+00> : vector<8x32xf32>
      %93 = tpu.matmul %92, %91, %cst_32 {dimension_numbers = #tpu.dot_dimension_numbers<[1], [0], [0], [1], [0, 0, 1, 1], [], []>} : vector<8x32xbf16>, vector<32x32xbf16>, vector<8x32xf32> -> vector<8x32xf32>
      %c2 = arith.constant 2 : index
      %c0_33 = arith.constant 0 : index
      %94 = vector.load %arg3[%c2, %c0_33] : memref<4x32xf32, #tpu.memory_space<vmem>>, vector<1x32xf32>
      %95 = vector.broadcast %94 : vector<1x32xf32> to vector<8x32xf32>
      %96 = arith.addf %93, %95 : vector<8x32xf32>
      %cst_34 = arith.constant 5.000000e-01 : f32
      %97 = vector.broadcast %cst_34 : f32 to vector<8x32xf32>
      %98 = arith.mulf %97, %96 : vector<8x32xf32>
      %cst_35 = arith.constant 0.707106769 : f32
      %99 = vector.broadcast %cst_35 : f32 to vector<8x32xf32>
      %100 = arith.mulf %96, %99 : vector<8x32xf32>
      %101 = math.erf %100 : vector<8x32xf32>
      %cst_36 = arith.constant 1.000000e+00 : f32
      %102 = vector.broadcast %cst_36 : f32 to vector<8x32xf32>
      %103 = arith.addf %102, %101 : vector<8x32xf32>
      %104 = arith.mulf %98, %103 : vector<8x32xf32>
      %c0_37 = arith.constant 0 : index
      %c0_38 = arith.constant 0 : index
      %105 = vector.load %arg10[%c0_37, %c0_38] : memref<32x32xbf16, #tpu.memory_space<vmem>>, vector<32x32xbf16>
      %106 = arith.truncf %104 : vector<8x32xf32> to vector<8x32xbf16>
      %cst_39 = arith.constant dense<0.000000e+00> : vector<8x32xf32>
      %107 = tpu.matmul %106, %105, %cst_39 {dimension_numbers = #tpu.dot_dimension_numbers<[1], [0], [0], [1], [0, 0, 1, 1], [], []>} : vector<8x32xbf16>, vector<32x32xbf16>, vector<8x32xf32> -> vector<8x32xf32>
      %c3 = arith.constant 3 : index
      %c0_40 = arith.constant 0 : index
      %108 = vector.load %arg3[%c3, %c0_40] : memref<4x32xf32, #tpu.memory_space<vmem>>, vector<1x32xf32>
      %109 = vector.broadcast %108 : vector<1x32xf32> to vector<8x32xf32>
      %110 = arith.addf %107, %109 : vector<8x32xf32>
      %111 = arith.mulf %110, %110 : vector<8x32xf32>
      %cst_41 = arith.constant dense<0.000000e+00> : vector<8xf32>
      %112 = vector.multi_reduction <add>, %111, %cst_41 [1] : vector<8x32xf32> to vector<8xf32>
      %113 = vector.shape_cast %112 : vector<8xf32> to vector<8x1xf32>
      %cst_42 = arith.constant 1.000000e-24 : f32
      %114 = vector.broadcast %cst_42 : f32 to vector<8x1xf32>
      %115 = arith.maximumf %113, %114 : vector<8x1xf32>
      %116 = math.rsqrt %115 : vector<8x1xf32>
      %117 = vector.broadcast %116 : vector<8x1xf32> to vector<8x32xf32>
      %118 = arith.mulf %110, %117 : vector<8x32xf32>
      %c0_43 = arith.constant 0 : index
      %c0_44 = arith.constant 0 : index
      %119 = vector.load %arg11[%c0_43, %c0_44] : memref<8x32xf32, #tpu.memory_space<vmem>>, vector<8x32xf32>
      tpu.vector_store %arg11[%c0_43, %c0_44], %118 {strides = array<i32>} : memref<8x32xf32, #tpu.memory_space<vmem>>, vector<8x32xf32>,
    } else {
    }
    return
  }
  func.func @transform_0(%arg0: i32, %arg1: i32) -> (i32, i32) {
    %c0_i32 = arith.constant 0 : i32
    %c0_i32_0 = arith.constant 0 : i32
    return %arg0, %c0_i32 : i32, i32
  }
  func.func @transform_1(%arg0: i32, %arg1: i32) -> (i32, i32) {
    %c0_i32 = arith.constant 0 : i32
    %c0_i32_0 = arith.constant 0 : i32
    %c0_i32_1 = arith.constant 0 : i32
    return %c0_i32, %c0_i32_0 : i32, i32
  }
  func.func @transform_2(%arg0: i32, %arg1: i32) -> (i32, i32, i32) {
    %c0_i32 = arith.constant 0 : i32
    %c0_i32_0 = arith.constant 0 : i32
    %c0_i32_1 = arith.constant 0 : i32
    %c0_i32_2 = arith.constant 0 : i32
    return %c0_i32, %c0_i32_0, %c0_i32_1 : i32, i32, i32
  }
  func.func @transform_3(%arg0: i32, %arg1: i32) -> (i32, i32, i32) {
    %c0_i32 = arith.constant 0 : i32
    %c0_i32_0 = arith.constant 0 : i32
    %c0_i32_1 = arith.constant 0 : i32
    %c0_i32_2 = arith.constant 0 : i32
    return %c0_i32, %c0_i32_0, %c0_i32_1 : i32, i32, i32
  }
  func.func @transform_4(%arg0: i32, %arg1: i32) -> (i32, i32, i32) {
    %c0_i32 = arith.constant 0 : i32
    %c0_i32_0 = arith.constant 0 : i32
    %c0_i32_1 = arith.constant 0 : i32
    %c0_i32_2 = arith.constant 0 : i32
    return %c0_i32, %c0_i32_0, %c0_i32_1 : i32, i32, i32
  }
  func.func @transform_5(%arg0: i32, %arg1: i32) -> (i32, i32, i32) {
    %c0_i32 = arith.constant 0 : i32
    %c0_i32_0 = arith.constant 0 : i32
    %c0_i32_1 = arith.constant 0 : i32
    %c0_i32_2 = arith.constant 0 : i32
    return %c0_i32, %c0_i32_0, %c0_i32_1 : i32, i32, i32
  }
  func.func @transform_6(%arg0: i32, %arg1: i32) -> (i32, i32, i32) {
    %c0_i32 = arith.constant 0 : i32
    %c0_i32_0 = arith.constant 0 : i32
    %c0_i32_1 = arith.constant 0 : i32
    %c0_i32_2 = arith.constant 0 : i32
    return %c0_i32, %c0_i32_0, %c0_i32_1 : i32, i32, i32
  }
  func.func @transform_7(%arg0: i32, %arg1: i32) -> (i32, i32) {
    %c0_i32 = arith.constant 0 : i32
    %c0_i32_0 = arith.constant 0 : i32
    %c0_i32_1 = arith.constant 0 : i32
    return %c0_i32, %c0_i32_0 : i32, i32
  }
  func.func @transform_8(%arg0: i32, %arg1: i32) -> (i32, i32) {
    %c0_i32 = arith.constant 0 : i32
    %c0_i32_0 = arith.constant 0 : i32
    %c0_i32_1 = arith.constant 0 : i32
    return %c0_i32, %c0_i32_0 : i32, i32
  }
  func.func @transform_9(%arg0: i32, %arg1: i32) -> (i32, i32) {
    %c0_i32 = arith.constant 0 : i32
    %c0_i32_0 = arith.constant 0 : i32
    return %arg0, %c0_i32 : i32, i32
  }
}

</mosaic_0001>

<llo_original>
// kernel: transformer_projection.1
$region0: #{transformer_projection.1}
  #allocation0 [shape = 'u32[]', space=smem, size = 0x4, offset = 0x4, fixed_abs, tag = 'smem constant byte address 0x4 - core index']
  #allocation1 [shape = 'u32[72,128]{1,0:T(1,128)}', space=vmem, size = 0x9000, scoped, tag = 'internal scratch']
  #allocation2 [shape = 'f32[8,32]{1,0:T(8,128)}', space=vmem, size = 0x1000, scoped, tag = 'scratch operand']
  %s0 = inlined_call_operand.vmem [shape: f32[8,32], index: 0, kind: input, shape index: {}]
  %s1 = inlined_call_operand.vmem [shape: f32[4,32], index: 1, kind: input, shape index: {}]
  %s2 = inlined_call_operand.vmem [shape: bf16[2,32,32], index: 2, kind: input, shape index: {}]
  %s3 = inlined_call_operand.vmem [shape: bf16[2,32,64], index: 3, kind: input, shape index: {}]
  %s4 = inlined_call_operand.vmem [shape: bf16[2,64,32], index: 4, kind: input, shape index: {}]
  %s5 = inlined_call_operand.vmem [shape: f32[2,6,32], index: 5, kind: input, shape index: {}]
  %s6 = inlined_call_operand.vmem [shape: f32[2,1,64], index: 6, kind: input, shape index: {}]
  %s7 = inlined_call_operand.vmem [shape: bf16[32,32], index: 7, kind: input, shape index: {}]
  %s8 = inlined_call_operand.vmem [shape: bf16[32,32], index: 8, kind: input, shape index: {}]
  %s9 = inlined_call_operand.vmem [shape: f32[8,32], index: 9, kind: output, shape index: {}]
  %s10 = sld [smem:[#allocation0]]
  $region77: #{transformer_projection.1} parent=0
    _
  %s12 = ssub.s32 1, %s10
  %s13 = scalar_select 0, %s12, %s10
  loop: start=0, step=1, limit=4
  $region2: #{transformer_projection.1} parent=0 // loop_pre_header
    _
  $region3: #{transformer_projection.1} parent=0 // loop_header
    %s15 = sphi 0, %s19
    %p16 = scmp.ge.s32.totalorder %s15, 4
    %s22 = sphi 0, %s34
    %s23 = sphi 0, %s30
    %s24 = sphi 0, %s22
    %s25 = sphi 0, %s23
    %s26 = sphi 0, %s24
    %s27 = sphi 0, %s25
    %s37 = sphi 0, %s39
    %s40 = sphi 0, %s37
    %s41 = sphi 0, %s40
    %s57 = sphi 0, %s41
    %s61 = sphi 0, %s61
    %s63 = sphi 0, %s61
    %s64 = sphi 0, %s63
    %s78 = sphi 0, %s64
    %s82 = sphi 0, %s82
    %s84 = sphi 0, %s82
    %s85 = sphi 0, %s84
    %s99 = sphi 0, %s85
    %s103 = sphi 0, %s103
    %s105 = sphi 0, %s103
    %s106 = sphi 0, %s105
    %s120 = sphi 0, %s106
    %s124 = sphi 0, %s124
    %s126 = sphi 0, %s124
    %s127 = sphi 0, %s126
    %s141 = sphi 0, %s127
    %s145 = sphi 0, %s145
    %s147 = sphi 0, %s145
    %s148 = sphi 0, %s147
    %s162 = sphi 0, %s148
    %s166 = sphi 0, %s166
    %s168 = sphi 0, %s166
    %s169 = sphi 0, %s168
    %s183 = sphi 0, %s169
    %s187 = sphi 0, %s187
    %s189 = sphi 0, %s187
    %s190 = sphi 0, %s189
    %s204 = sphi 0, %s190
    %s208 = sphi 0, %s208
    %s210 = sphi 0, %s208
    %s211 = sphi 0, %s210
    %s225 = sphi 0, %s211
    %s231 = sphi 0, %s233
    %s234 = sphi 0, %s231
    %s235 = sphi 0, %s234
    %s251 = sphi 0, %s235
  $region4: #{transformer_projection.1} parent=0 // loop_header_branch
    %18 = sbr.rel (%p16) target = $region8
  $region5: #{transformer_projection.1} parent=0 // loop_body
    %s20 = ssub.s32 %s15, 1
    %s21 = ssub.s32 %s15, 2
    %s28 = sadd.s32 1, %s23
    %p29 = scmp.ge.s32.totalorder %s28, 2
    %s30 = scalar_select %p29, 0, %s28
    %s31 = sadd.s32 1, %s22
    %s32 = scalar_select %p29, %s31, %s22
    %p33 = scmp.ge.s32.totalorder %s32, 1
    %s34 = scalar_select %p33, 0, %s32
    %s35 = ssub.s32 %s22, %s34
    %p36 = scmp.eq.s32.totalorder %s35, 0
    %s38 = sadd.s32 %s37, 1
    %s39 = scalar_select %p36, %s37, %s38
    %p42 = pneg %p36
    %p43 = scmp.eq.s32.totalorder %s15, 1
    %p44 = por %p42, %p43
    %p45 = scmp.ne.s32.totalorder %s37, %s40
    %p46 = scmp.eq.s32.totalorder %s15, 0
    %p47 = por %p45, %p46
    %p48 = scmp.ne.s32.totalorder %s37, %s40
    %p49 = scmp.eq.s32.totalorder %s20, 1
    %p50 = por %p48, %p49
    %p51 = scmp.ne.s32.totalorder %s40, %s41
    %p52 = scmp.eq.s32.totalorder %s20, 0
    %p53 = por %p51, %p52
    %p54 = scmp.ne.s32.totalorder %s40, %s41
    %p55 = scmp.eq.s32.totalorder %s21, 1
    %p56 = por %p54, %p55
    %p58 = scmp.ne.s32.totalorder %s41, %s57
    %p59 = scmp.eq.s32.totalorder %s21, 0
    %p60 = por %p58, %p59
    %s62 = sadd.s32 %s61, 1
    %p65 = scmp.eq.s32.totalorder %s15, 1
    %p66 = scmp.ne.s32.totalorder %s61, %s63
    %p67 = scmp.eq.s32.totalorder %s15, 0
    %p68 = por %p66, %p67
    %p69 = scmp.ne.s32.totalorder %s61, %s63
    %p70 = scmp.eq.s32.totalorder %s20, 1
    %p71 = por %p69, %p70
    %p72 = scmp.ne.s32.totalorder %s63, %s64
    %p73 = scmp.eq.s32.totalorder %s20, 0
    %p74 = por %p72, %p73
    %p75 = scmp.ne.s32.totalorder %s63, %s64
    %p76 = scmp.eq.s32.totalorder %s21, 1
    %p77 = por %p75, %p76
    %p79 = scmp.ne.s32.totalorder %s64, %s78
    %p80 = scmp.eq.s32.totalorder %s21, 0
    %p81 = por %p79, %p80
    %s83 = sadd.s32 %s82, 1
    %p86 = scmp.eq.s32.totalorder %s15, 1
    %p87 = scmp.ne.s32.totalorder %s82, %s84
    %p88 = scmp.eq.s32.totalorder %s15, 0
    %p89 = por %p87, %p88
    %p90 = scmp.ne.s32.totalorder %s82, %s84
    %p91 = scmp.eq.s32.totalorder %s20, 1
    %p92 = por %p90, %p91
    %p93 = scmp.ne.s32.totalorder %s84, %s85
    %p94 = scmp.eq.s32.totalorder %s20, 0
    %p95 = por %p93, %p94
    %p96 = scmp.ne.s32.totalorder %s84, %s85
    %p97 = scmp.eq.s32.totalorder %s21, 1
    %p98 = por %p96, %p97
    %p100 = scmp.ne.s32.totalorder %s85, %s99
    %p101 = scmp.eq.s32.totalorder %s21, 0
    %p102 = por %p100, %p101
    %s104 = sadd.s32 %s103, 1
    %p107 = scmp.eq.s32.totalorder %s15, 1
    %p108 = scmp.ne.s32.totalorder %s103, %s105
    %p109 = scmp.eq.s32.totalorder %s15, 0
    %p110 = por %p108, %p109
    %p111 = scmp.ne.s32.totalorder %s103, %s105
    %p112 = scmp.eq.s32.totalorder %s20, 1
    %p113 = por %p111, %p112
    %p114 = scmp.ne.s32.totalorder %s105, %s106
    %p115 = scmp.eq.s32.totalorder %s20, 0
    %p116 = por %p114, %p115
    %p117 = scmp.ne.s32.totalorder %s105, %s106
    %p118 = scmp.eq.s32.totalorder %s21, 1
    %p119 = por %p117, %p118
    %p121 = scmp.ne.s32.totalorder %s106, %s120
    %p122 = scmp.eq.s32.totalorder %s21, 0
    %p123 = por %p121, %p122
    %s125 = sadd.s32 %s124, 1
    %p128 = scmp.eq.s32.totalorder %s15, 1
    %p129 = scmp.ne.s32.totalorder %s124, %s126
    %p130 = scmp.eq.s32.totalorder %s15, 0
    %p131 = por %p129, %p130
    %p132 = scmp.ne.s32.totalorder %s124, %s126
    %p133 = scmp.eq.s32.totalorder %s20, 1
    %p134 = por %p132, %p133
    %p135 = scmp.ne.s32.totalorder %s126, %s127
    %p136 = scmp.eq.s32.totalorder %s20, 0
    %p137 = por %p135, %p136
    %p138 = scmp.ne.s32.totalorder %s126, %s127
    %p139 = scmp.eq.s32.totalorder %s21, 1
    %p140 = por %p138, %p139
    %p142 = scmp.ne.s32.totalorder %s127, %s141
    %p143 = scmp.eq.s32.totalorder %s21, 0
    %p144 = por %p142, %p143
    %s146 = sadd.s32 %s145, 1
    %p149 = scmp.eq.s32.totalorder %s15, 1
    %p150 = scmp.ne.s32.totalorder %s145, %s147
    %p151 = scmp.eq.s32.totalorder %s15, 0
    %p152 = por %p150, %p151
    %p153 = scmp.ne.s32.totalorder %s145, %s147
    %p154 = scmp.eq.s32.totalorder %s20, 1
    %p155 = por %p153, %p154
    %p156 = scmp.ne.s32.totalorder %s147, %s148
    %p157 = scmp.eq.s32.totalorder %s20, 0
    %p158 = por %p156, %p157
    %p159 = scmp.ne.s32.totalorder %s147, %s148
    %p160 = scmp.eq.s32.totalorder %s21, 1
    %p161 = por %p159, %p160
    %p163 = scmp.ne.s32.totalorder %s148, %s162
    %p164 = scmp.eq.s32.totalorder %s21, 0
    %p165 = por %p163, %p164
    %s167 = sadd.s32 %s166, 1
    %p170 = scmp.eq.s32.totalorder %s15, 1
    %p171 = scmp.ne.s32.totalorder %s166, %s168
    %p172 = scmp.eq.s32.totalorder %s15, 0
    %p173 = por %p171, %p172
    %p174 = scmp.ne.s32.totalorder %s166, %s168
    %p175 = scmp.eq.s32.totalorder %s20, 1
    %p176 = por %p174, %p175
    %p177 = scmp.ne.s32.totalorder %s168, %s169
    %p178 = scmp.eq.s32.totalorder %s20, 0
    %p179 = por %p177, %p178
    %p180 = scmp.ne.s32.totalorder %s168, %s169
    %p181 = scmp.eq.s32.totalorder %s21, 1
    %p182 = por %p180, %p181
    %p184 = scmp.ne.s32.totalorder %s169, %s183
    %p185 = scmp.eq.s32.totalorder %s21, 0
    %p186 = por %p184, %p185
    %s188 = sadd.s32 %s187, 1
    %p191 = scmp.eq.s32.totalorder %s15, 1
    %p192 = scmp.ne.s32.totalorder %s187, %s189
    %p193 = scmp.eq.s32.totalorder %s15, 0
    %p194 = por %p192, %p193
    %p195 = scmp.ne.s32.totalorder %s187, %s189
    %p196 = scmp.eq.s32.totalorder %s20, 1
    %p197 = por %p195, %p196
    %p198 = scmp.ne.s32.totalorder %s189, %s190
    %p199 = scmp.eq.s32.totalorder %s20, 0
    %p200 = por %p198, %p199
    %p201 = scmp.ne.s32.totalorder %s189, %s190
    %p202 = scmp.eq.s32.totalorder %s21, 1
    %p203 = por %p201, %p202
    %p205 = scmp.ne.s32.totalorder %s190, %s204
    %p206 = scmp.eq.s32.totalorder %s21, 0
    %p207 = por %p205, %p206
    %s209 = sadd.s32 %s208, 1
    %p212 = scmp.eq.s32.totalorder %s15, 1
    %p213 = scmp.ne.s32.totalorder %s208, %s210
    %p214 = scmp.eq.s32.totalorder %s15, 0
    %p215 = por %p213, %p214
    %p216 = scmp.ne.s32.totalorder %s208, %s210
    %p217 = scmp.eq.s32.totalorder %s20, 1
    %p218 = por %p216, %p217
    %p219 = scmp.ne.s32.totalorder %s210, %s211
    %p220 = scmp.eq.s32.totalorder %s20, 0
    %p221 = por %p219, %p220
    %p222 = scmp.ne.s32.totalorder %s210, %s211
    %p223 = scmp.eq.s32.totalorder %s21, 1
    %p224 = por %p222, %p223
    %p226 = scmp.ne.s32.totalorder %s211, %s225
    %p227 = scmp.eq.s32.totalorder %s21, 0
    %p228 = por %p226, %p227
    %s229 = ssub.s32 %s22, %s34
    %p230 = scmp.eq.s32.totalorder %s229, 0
    %s232 = sadd.s32 %s231, 1
    %s233 = scalar_select %p230, %s231, %s232
    %p236 = pneg %p230
    %p237 = scmp.eq.s32.totalorder %s15, 1
    %p238 = por %p236, %p237
    %p239 = scmp.ne.s32.totalorder %s231, %s234
    %p240 = scmp.eq.s32.totalorder %s15, 0
    %p241 = por %p239, %p240
    %p242 = scmp.ne.s32.totalorder %s231, %s234
    %p243 = scmp.eq.s32.totalorder %s20, 1
    %p244 = por %p242, %p243
    %p245 = scmp.ne.s32.totalorder %s234, %s235
    %p246 = scmp.eq.s32.totalorder %s20, 0
    %p247 = por %p245, %p246
    %p248 = scmp.ne.s32.totalorder %s234, %s235
    %p249 = scmp.eq.s32.totalorder %s21, 1
    %p250 = por %p248, %p249
    %p252 = scmp.ne.s32.totalorder %s235, %s251
    %p253 = scmp.eq.s32.totalorder %s21, 0
    %p254 = por %p252, %p253
    %p255 = scmp.le.s32.totalorder 1, %s15
    %p256 = scmp.lt.s32.totalorder %s15, 3
    %p257 = pnand %p255, %p256
    %p258 = pneg %p257
    // Predicated region
    $region9: #{transformer_projection.1} parent=5 // pred_check
      _
    $region10: #{transformer_projection.1} parent=5 // pred_check_branch
      %260 = sbr.rel (%p257) target = $region12
    $region11: #{transformer_projection.1} parent=5 // pred_region
      %s261 = ssub.s32 %s15, 1
      // Predicated region
      $region13: #{transformer_projection.1} parent=11 // pred_check
        %p262 = pneg %p53
      $region14: #{transformer_projection.1} parent=11 // pred_check_branch
        %264 = sbr.rel (%p262) target = $region16
      $region15: #{transformer_projection.1} parent=11 // pred_region
        %p265 = scmp.lt.s32.totalorder %s24, 0
        %s266 = scalar_select %p265, %s24, 0
        %s267 = smul.addr %s266, 8
        %s268 = scalar_lea.vmem %s0, %s267
      $region16: #{transformer_projection.1} parent=11 // pred_fallthru
        _
      // Predicated region
      $region17: #{transformer_projection.1} parent=11 // pred_check
        %p269 = pneg %p74
      $region18: #{transformer_projection.1} parent=11 // pred_check_branch
        %271 = sbr.rel (%p269) target = $region20
      $region19: #{transformer_projection.1} parent=11 // pred_region
        _
      $region20: #{transformer_projection.1} parent=11 // pred_fallthru
        _
      // Predicated region
      $region21: #{transformer_projection.1} parent=11 // pred_check
        %p272 = pneg %p95
      $region22: #{transformer_projection.1} parent=11 // pred_check_branch
        %274 = sbr.rel (%p272) target = $region24
      $region23: #{transformer_projection.1} parent=11 // pred_region
        _
      $region24: #{transformer_projection.1} parent=11 // pred_fallthru
        _
      // Predicated region
      $region25: #{transformer_projection.1} parent=11 // pred_check
        %p275 = pneg %p116
      $region26: #{transformer_projection.1} parent=11 // pred_check_branch
        %277 = sbr.rel (%p275) target = $region28
      $region27: #{transformer_projection.1} parent=11 // pred_region
        _
      $region28: #{transformer_projection.1} parent=11 // pred_fallthru
        _
      // Predicated region
      $region29: #{transformer_projection.1} parent=11 // pred_check
        %p278 = pneg %p137
      $region30: #{transformer_projection.1} parent=11 // pred_check_branch
        %280 = sbr.rel (%p278) target = $region32
      $region31: #{transformer_projection.1} parent=11 // pred_region
        _
      $region32: #{transformer_projection.1} parent=11 // pred_fallthru
        _
      // Predicated region
      $region33: #{transformer_projection.1} parent=11 // pred_check
        %p281 = pneg %p158
      $region34: #{transformer_projection.1} parent=11 // pred_check_branch
        %283 = sbr.rel (%p281) target = $region36
      $region35: #{transformer_projection.1} parent=11 // pred_region
        _
      $region36: #{transformer_projection.1} parent=11 // pred_fallthru
        _
      // Predicated region
      $region37: #{transformer_projection.1} parent=11 // pred_check
        %p284 = pneg %p179
      $region38: #{transformer_projection.1} parent=11 // pred_check_branch
        %286 = sbr.rel (%p284) target = $region40
      $region39: #{transformer_projection.1} parent=11 // pred_region
        _
      $region40: #{transformer_projection.1} parent=11 // pred_fallthru
        _
      // Predicated region
      $region41: #{transformer_projection.1} parent=11 // pred_check
        %p287 = pneg %p200
      $region42: #{transformer_projection.1} parent=11 // pred_check_branch
        %289 = sbr.rel (%p287) target = $region44
      $region43: #{transformer_projection.1} parent=11 // pred_region
        _
      $region44: #{transformer_projection.1} parent=11 // pred_fallthru
        _
      // Predicated region
      $region45: #{transformer_projection.1} parent=11 // pred_check
        %p290 = pneg %p221
      $region46: #{transformer_projection.1} parent=11 // pred_check_branch
        %292 = sbr.rel (%p290) target = $region48
      $region47: #{transformer_projection.1} parent=11 // pred_region
        _
      $region48: #{transformer_projection.1} parent=11 // pred_fallthru
        _
    $region12: #{transformer_projection.1} parent=5 // pred_fallthru
      _
    %p293 = scmp.lt.s32.totalorder %s15, 2
    // Predicated region
    $region49: #{transformer_projection.1} parent=5 // pred_check
      %p294 = pneg %p293
    $region50: #{transformer_projection.1} parent=5 // pred_check_branch
      %296 = sbr.rel (%p294) target = $region52
    $region51: #{transformer_projection.1} parent=5 // pred_region
      _
    $region52: #{transformer_projection.1} parent=5 // pred_fallthru
      _
    %p297 = scmp.le.s32.totalorder 1, %s15
    %p298 = scmp.lt.s32.totalorder %s15, 3
    %p299 = pnand %p297, %p298
    %p300 = pneg %p299
    // Predicated region
    $region53: #{transformer_projection.1} parent=5 // pred_check
      _
    $region54: #{transformer_projection.1} parent=5 // pred_check_branch
      %302 = sbr.rel (%p299) target = $region56
    $region55: #{transformer_projection.1} parent=5 // pred_region
      %s303 = ssub.s32 %s15, 1
      %p304 = scmp.lt.s32.totalorder %s24, 0
      %s305 = scalar_select %p304, %s24, 0
      %s306 = smul.addr %s305, 8
      %s307 = scalar_lea.vmem %s0, %s306
      %p308 = pneg %p53
      %p309 = pneg %p50
      %p310 = pneg %p74
      %p311 = pneg %p71
      %p312 = pneg %p95
      %p313 = pneg %p92
      %p314 = pneg %p116
      %p315 = pneg %p113
      %p316 = pneg %p137
      %p317 = pneg %p134
      %p318 = pneg %p158
      %p319 = pneg %p155
      %p320 = pneg %p179
      %p321 = pneg %p176
      %p322 = pneg %p200
      %p323 = pneg %p197
      %p324 = pneg %p221
      %p325 = pneg %p218
      %p326 = pneg %p247
      %p327 = pneg %p244
      %p328 = scmp.lt.s32.totalorder %s24, 0
      %s329 = scalar_select %p328, %s24, 0
      %s330 = smul.addr %s329, 8
      %s331 = scalar_lea.vmem %s9, %s330
      %p332 = scmp.lt.s32.totalorder %s24, 0
      %s333 = scalar_select %p332, %s24, 0
      %s334 = smul.addr %s333, 8
      %s335 = scalar_lea.vmem %s0, %s334
      %p336 = scmp.lt.s32.totalorder %s24, 0
      %s337 = scalar_select %p336, %s24, 0
      %s338 = smul.addr %s337, 8
      %s339 = scalar_lea.vmem %s9, %s338
      %p341 = scmp.eq.s32.totalorder %s25, 0
      // Predicated region
      $region57: #{transformer_projection.1} parent=55 // pred_check
        %p342 = pneg %p341
      $region58: #{transformer_projection.1} parent=55 // pred_check_branch
        %344 = sbr.rel (%p342) target = $region60
      $region59: #{transformer_projection.1} parent=55 // pred_region
        %v345 = vld [vmem:[%s335] sm:$0xff]
        %v346 = vld [vmem:[%s1] sm:$0x1]
        %v347 = vld [vmem:[%s1 + $0x1] sm:$0x1]
        %vm348 = vcmask 261120
        %v349 = vsel %vm348, %v345, 0.0
        %350 = vadd.xlane.f32.xlu0 %v349
        %v351 = vpop.xlane.xlu0 %350
        %v352 = vrcp.pop 32.0
        %v353 = vmul.f32 32.0, %v352
        %v354 = vsub.f32 1.0, %v353
        %v355 = vmul.f32 %v352, %v354
        %v356 = vadd.f32 %v352, %v355
        %vm357 = vweird.f32 %v352
        %v358 = vsel %vm357, %v352, %v356
        %v359 = vmul.f32 %v351, %v358
        %v360 = vsub.f32 %v345, %v359
        %v361 = vmul.f32 %v360, %v360
        %v362 = vsel %vm348, %v361, 0.0
        %363 = vadd.xlane.f32.xlu0 %v362
        %v364 = vpop.xlane.xlu0 %363
        %v365 = vmul.f32 %v364, %v358
        %v366 = vadd.f32 %v365, 1e-05
        %v367 = vrsqrt.pop %v366
        %v368 = vmul.f32 %v367, %v366
        %v369 = vmul.f32 %v368, %v367
        %v370 = vmul.f32 0.5, %v369
        %v371 = vsub.f32 1.5, %v370
        %v372 = vmul.f32 %v367, %v371
        %vm373 = vweird.f32 %v366
        %vm374 = vweird.f32 %v367
        %vm375 = vmor %vm373, %vm374
        %v376 = vsel %vm375, %v367, %v372
        %v377 = vmul.f32 %v360, %v376
        %v378 = vperm.slane %v346, 0
        %v379 = vmul.f32 %v377, %v378
        %v380 = vperm.slane %v347, 0
        %v381 = vadd.f32 %v379, %v380
        %382 = vst.msk [vmem:[#allocation2] sm:$0xff] %vm348, %v381
      $region60: #{transformer_projection.1} parent=55 // pred_fallthru
        _
      %v383 = vld [vmem:[#allocation2] sm:$0xff]
      %s384 = smul.u32 %s25, 8
      %s385 = scalar_lea.vmem %s5, %s384
      %v386 = vld [vmem:[%s385] sm:$0x3f]
      %s387 = scalar_lea.vmem %s6, %s25
      %v388 = vld [vmem:[%s387] sm:$0x1]
      %s389 = smul.u32 %s25, 4
      %s390 = smul.addr %s389, 4
      %s391 = scalar_lea.vmem %s2, %s390
      %v392 = vld [vmem:[%s391] sm:$0xf]
      %v393 = vld [vmem:[%s391 + $0x4] sm:$0xf]
      %v394 = vld [vmem:[%s391 + $0x8] sm:$0xf]
      %v395 = vld [vmem:[%s391 + $0xc] sm:$0xf]
      %v396 = vpack.c.bf16 %v383, %v383
      %v397 = vperm.slane %v386, 0
      %v402 = vunpack.c.l.b16 %v392
      %v403 = vunpack.c.l.b16 %v393
      %v404 = vunpack.c.l.b16 %v394
      %v405 = vunpack.c.l.b16 %v395
      %v406 = vpack.c.b16 %v403, %v402
      %v407 = vpack.c.b16 %v405, %v404
      %vm410 = vcmask 261120
      %v412 = vsel %vm410, %v396, 0
      %414 = vmatpush.bf16.msra.mxu0 0
      %415 = vmatpush.bf16.msra.mxu0 0
      %416 = vmatpush.bf16.msra.mxu0 0
      %417 = vmatpush.bf16.msra.mxu0 0
      %418 = vmatpush.bf16.msra.mxu0 0
      %419 = vmatpush.bf16.msra.mxu0 0
      %420 = vmatpush.bf16.msra.mxu0 %v407
      %421 = vmatpush.bf16.msra.mxu0 %v406
      %422 = vmatmul.bf16.gmra.mxu0 %v412
      %v423 = vpop.f32.mrf.mxu0
      %v424 = vadd.f32 %v397, %v423
      %v425 = vpop.f32.mrf.mxu0
      %426 = vdwg.mxu0
      %v427 = vadd.f32 %v383, %v424
      %v428 = vsel %vm410, %v427, 0.0
      %429 = vadd.xlane.f32.xlu0 %v428
      %v430 = vpop.xlane.xlu0 %429
      %v431 = vrcp.pop 32.0
      %v432 = vmul.f32 32.0, %v431
      %v433 = vsub.f32 1.0, %v432
      %v434 = vmul.f32 %v431, %v433
      %v435 = vadd.f32 %v431, %v434
      %vm436 = vweird.f32 %v431
      %v437 = vsel %vm436, %v431, %v435
      %v438 = vmul.f32 %v430, %v437
      %v439 = vsub.f32 %v427, %v438
      %v440 = vmul.f32 %v439, %v439
      %v441 = vsel %vm410, %v440, 0.0
      %442 = vadd.xlane.f32.xlu0 %v441
      %v443 = vpop.xlane.xlu0 %442
      %v444 = vmul.f32 %v443, %v437
      %v445 = vadd.f32 %v444, 1e-05
      %v446 = vrsqrt.pop %v445
      %v447 = vmul.f32 %v446, %v445
      %v448 = vmul.f32 %v447, %v446
      %v449 = vmul.f32 0.5, %v448
      %v450 = vsub.f32 1.5, %v449
      %v451 = vmul.f32 %v446, %v450
      %vm452 = vweird.f32 %v445
      %vm453 = vweird.f32 %v446
      %vm454 = vmor %vm452, %vm453
      %v455 = vsel %vm454, %v446, %v451
      %v456 = vmul.f32 %v439, %v455
      %v457 = vperm.slane %v386, 1
      %v458 = vmul.f32 %v456, %v457
      %v459 = vperm.slane %v386, 2
      %v460 = vadd.f32 %v458, %v459
      %s461 = smul.addr %s389, 4
      %s462 = scalar_lea.vmem %s3, %s461
      %v463 = vld [vmem:[%s462] sm:$0xf]
      %v464 = vld [vmem:[%s462 + $0x4] sm:$0xf]
      %v465 = vld [vmem:[%s462 + $0x8] sm:$0xf]
      %v466 = vld [vmem:[%s462 + $0xc] sm:$0xf]
      %v467 = vpack.c.bf16 %v460, %v460
      %v469 = vperm.slane %v388, 0
      %v475 = vunpack.c.l.b16 %v463
      %v476 = vunpack.c.l.b16 %v464
      %v477 = vunpack.c.l.b16 %v465
      %v478 = vunpack.c.l.b16 %v466
      %v479 = vpack.c.b16 %v476, %v475
      %v480 = vpack.c.b16 %v478, %v477
      %v484 = vsel %vm410, %v467, 0
      %486 = vmatpush.bf16.msra.mxu0 0
      %487 = vmatpush.bf16.msra.mxu0 0
      %488 = vmatpush.bf16.msra.mxu0 0
      %489 = vmatpush.bf16.msra.mxu0 0
      %490 = vmatpush.bf16.msra.mxu0 0
      %491 = vmatpush.bf16.msra.mxu0 0
      %492 = vmatpush.bf16.msra.mxu0 %v480
      %493 = vmatpush.bf16.msra.mxu0 %v479
      %494 = vmatmul.bf16.gmra.mxu0 %v484
      %v495 = vpop.f32.mrf.mxu0
      %v496 = vadd.f32 %v469, %v495
      %v497 = vpop.f32.mrf.mxu0
      %498 = vdwg.mxu0
      %v499 = vmul.f32 %v496, 0.5
      %v500 = vmul.f32 %v496, 0.70710677
      %v501 = vmul.f32 %v500, %v500
      %v502 = vmin.f32 16.0, %v501
      %v503 = vmul.f32 %v502, 2.1237322e-06
      %v504 = vadd.f32 %v503, 0.00028619796
      %v505 = vmul.f32 %v502, %v504
      %v506 = vadd.f32 %v505, 0.0036580483
      %v507 = vmul.f32 %v502, %v506
      %v508 = vadd.f32 %v507, 0.05243302
      %v509 = vmul.f32 %v502, %v508
      %v510 = vadd.f32 %v509, 0.18741608
      %v511 = vmul.f32 %v502, %v510
      %v512 = vadd.f32 %v511, 1.1283791
      %v513 = vmul.f32 %v500, %v512
      %v514 = vmul.f32 %v502, 3.8918573e-05
      %v515 = vadd.f32 %v514, 0.001143296
      %v516 = vmul.f32 %v502, %v515
      %v517 = vadd.f32 %v516, 0.014752088
      %v518 = vmul.f32 %v502, %v517
      %v519 = vadd.f32 %v518, 0.112945676
      %v520 = vmul.f32 %v502, %v519
      %v521 = vadd.f32 %v520, 0.4994258
      %v522 = vmul.f32 %v502, %v521
      %v523 = vadd.f32 %v522, 1.0
      %v524 = vrcp.pop %v523
      %v525 = vmul.f32 %v523, %v524
      %v526 = vsub.f32 1.0, %v525
      %v527 = vmul.f32 %v524, %v526
      %v528 = vadd.f32 %v524, %v527
      %vm529 = vweird.f32 %v523
      %vm530 = vweird.f32 %v524
      %vm531 = vmor %vm529, %vm530
      %v532 = vsel %vm531, %v524, %v528
      %v533 = vand.u32 2147483647, %v523
      %vm534 = vcmp.eq.f32.partialorder %v533, 8.507059e+37
      %v535 = vand.u32 %v523, 2147483648
      %v536 = vor.u32 1.1754944e-38, %v535
      %v537 = vsel %vm534, %v536, %v532
      %v538 = vmul.f32 %v513, %v537
      %v539 = vmin.f32 %v538, 1.0
      %v540 = vmax.f32 %v539, -1.0
      %v541 = vadd.f32 %v540, 1.0
      %v542 = vmul.f32 %v499, %v541
      %s543 = smul.addr %s384, 4
      %s544 = scalar_lea.vmem %s4, %s543
      %v545 = vld [vmem:[%s544] sm:$0xf]
      %v546 = vld [vmem:[%s544 + $0x4] sm:$0xf]
      %v547 = vld [vmem:[%s544 + $0x8] sm:$0xf]
      %v548 = vld [vmem:[%s544 + $0xc] sm:$0xf]
      %v549 = vld [vmem:[%s544 + $0x10] sm:$0xf]
      %v550 = vld [vmem:[%s544 + $0x14] sm:$0xf]
      %v551 = vld [vmem:[%s544 + $0x18] sm:$0xf]
      %v552 = vld [vmem:[%s544 + $0x1c] sm:$0xf]
      %v553 = vpack.c.bf16 %v542, %v542
      %v554 = vperm.slane %v386, 3
      %v563 = vunpack.c.l.b16 %v545
      %v564 = vunpack.c.l.b16 %v546
      %v565 = vunpack.c.l.b16 %v547
      %v566 = vunpack.c.l.b16 %v548
      %v567 = vunpack.c.l.b16 %v549
      %v568 = vunpack.c.l.b16 %v550
      %v569 = vunpack.c.l.b16 %v551
      %v570 = vunpack.c.l.b16 %v552
      %v571 = vpack.c.b16 %v564, %v563
      %v572 = vpack.c.b16 %v566, %v565
      %v573 = vpack.c.b16 %v568, %v567
      %v574 = vpack.c.b16 %v570, %v569
      %vm579 = vcmask 523264
      %v581 = vsel %vm579, %v553, 0
      %583 = vmatpush.bf16.msra.mxu0 0
      %584 = vmatpush.bf16.msra.mxu0 0
      %585 = vmatpush.bf16.msra.mxu0 0
      %586 = vmatpush.bf16.msra.mxu0 0
      %587 = vmatpush.bf16.msra.mxu0 %v574
      %588 = vmatpush.bf16.msra.mxu0 %v573
      %589 = vmatpush.bf16.msra.mxu0 %v572
      %590 = vmatpush.bf16.msra.mxu0 %v571
      %591 = vmatmul.bf16.gmra.mxu0 %v581
      %v592 = vpop.f32.mrf.mxu0
      %v593 = vadd.f32 %v554, %v592
      %v594 = vpop.f32.mrf.mxu0
      %595 = vdwg.mxu0
      %v596 = vadd.f32 %v460, %v593
      %v597 = vsel %vm410, %v596, 0.0
      %598 = vadd.xlane.f32.xlu0 %v597
      %v599 = vpop.xlane.xlu0 %598
      %v600 = vmul.f32 %v599, %v437
      %v601 = vsub.f32 %v596, %v600
      %v602 = vmul.f32 %v601, %v601
      %v603 = vsel %vm410, %v602, 0.0
      %604 = vadd.xlane.f32.xlu0 %v603
      %v605 = vpop.xlane.xlu0 %604
      %v606 = vmul.f32 %v605, %v437
      %v607 = vadd.f32 %v606, 1e-05
      %v608 = vrsqrt.pop %v607
      %v609 = vmul.f32 %v608, %v607
      %v610 = vmul.f32 %v609, %v608
      %v611 = vmul.f32 0.5, %v610
      %v612 = vsub.f32 1.5, %v611
      %v613 = vmul.f32 %v608, %v612
      %vm614 = vweird.f32 %v607
      %vm615 = vweird.f32 %v608
      %vm616 = vmor %vm614, %vm615
      %v617 = vsel %vm616, %v608, %v613
      %v618 = vmul.f32 %v601, %v617
      %v619 = vperm.slane %v386, 4
      %v620 = vmul.f32 %v618, %v619
      %v621 = vperm.slane %v386, 5
      %v622 = vadd.f32 %v620, %v621
      %623 = vst.msk [vmem:[#allocation2] sm:$0xff] %vm410, %v622
      %p624 = scmp.eq.s32.totalorder %s25, 1
      // Predicated region
      $region61: #{transformer_projection.1} parent=55 // pred_check
        %p625 = pneg %p624
      $region62: #{transformer_projection.1} parent=55 // pred_check_branch
        %627 = sbr.rel (%p625) target = $region64
      $region63: #{transformer_projection.1} parent=55 // pred_region
        %v628 = vld [vmem:[%s7] sm:$0xf]
        %v629 = vld [vmem:[%s7 + $0x4] sm:$0xf]
        %v630 = vld [vmem:[%s7 + $0x8] sm:$0xf]
        %v631 = vld [vmem:[%s7 + $0xc] sm:$0xf]
        %v632 = vpack.c.bf16 %v622, %v622
        %v633 = vld [vmem:[%s1 + $0x2] sm:$0x1]
        %v634 = vperm.slane %v633, 0
        %v639 = vunpack.c.l.b16 %v628
        %v640 = vunpack.c.l.b16 %v629
        %v641 = vunpack.c.l.b16 %v630
        %v642 = vunpack.c.l.b16 %v631
        %v643 = vpack.c.b16 %v640, %v639
        %v644 = vpack.c.b16 %v642, %v641
        %v648 = vsel %vm410, %v632, 0
        %650 = vmatpush.bf16.msra.mxu0 0
        %651 = vmatpush.bf16.msra.mxu0 0
        %652 = vmatpush.bf16.msra.mxu0 0
        %653 = vmatpush.bf16.msra.mxu0 0
        %654 = vmatpush.bf16.msra.mxu0 0
        %655 = vmatpush.bf16.msra.mxu0 0
        %656 = vmatpush.bf16.msra.mxu0 %v644
        %657 = vmatpush.bf16.msra.mxu0 %v643
        %658 = vmatmul.bf16.gmra.mxu0 %v648
        %v659 = vpop.f32.mrf.mxu0
        %v660 = vadd.f32 %v634, %v659
        %v661 = vpop.f32.mrf.mxu0
        %662 = vdwg.mxu0
        %v663 = vmul.f32 %v660, 0.5
        %v664 = vmul.f32 %v660, 0.70710677
        %v665 = vmul.f32 %v664, %v664
        %v666 = vmin.f32 16.0, %v665
        %v667 = vmul.f32 %v666, 2.1237322e-06
        %v668 = vadd.f32 %v667, 0.00028619796
        %v669 = vmul.f32 %v666, %v668
        %v670 = vadd.f32 %v669, 0.0036580483
        %v671 = vmul.f32 %v666, %v670
        %v672 = vadd.f32 %v671, 0.05243302
        %v673 = vmul.f32 %v666, %v672
        %v674 = vadd.f32 %v673, 0.18741608
        %v675 = vmul.f32 %v666, %v674
        %v676 = vadd.f32 %v675, 1.1283791
        %v677 = vmul.f32 %v664, %v676
        %v678 = vmul.f32 %v666, 3.8918573e-05
        %v679 = vadd.f32 %v678, 0.001143296
        %v680 = vmul.f32 %v666, %v679
        %v681 = vadd.f32 %v680, 0.014752088
        %v682 = vmul.f32 %v666, %v681
        %v683 = vadd.f32 %v682, 0.112945676
        %v684 = vmul.f32 %v666, %v683
        %v685 = vadd.f32 %v684, 0.4994258
        %v686 = vmul.f32 %v666, %v685
        %v687 = vadd.f32 %v686, 1.0
        %v688 = vrcp.pop %v687
        %v689 = vmul.f32 %v687, %v688
        %v690 = vsub.f32 1.0, %v689
        %v691 = vmul.f32 %v688, %v690
        %v692 = vadd.f32 %v688, %v691
        %vm693 = vweird.f32 %v687
        %vm694 = vweird.f32 %v688
        %vm695 = vmor %vm693, %vm694
        %v696 = vsel %vm695, %v688, %v692
        %v697 = vand.u32 2147483647, %v687
        %vm698 = vcmp.eq.f32.partialorder %v697, 8.507059e+37
        %v699 = vand.u32 %v687, 2147483648
        %v700 = vor.u32 1.1754944e-38, %v699
        %v701 = vsel %vm698, %v700, %v696
        %v702 = vmul.f32 %v677, %v701
        %v703 = vmin.f32 %v702, 1.0
        %v704 = vmax.f32 %v703, -1.0
        %v705 = vadd.f32 %v704, 1.0
        %v706 = vmul.f32 %v663, %v705
        %v707 = vld [vmem:[%s8] sm:$0xf]
        %v708 = vld [vmem:[%s8 + $0x4] sm:$0xf]
        %v709 = vld [vmem:[%s8 + $0x8] sm:$0xf]
        %v710 = vld [vmem:[%s8 + $0xc] sm:$0xf]
        %v711 = vpack.c.bf16 %v706, %v706
        %v712 = vld [vmem:[%s1 + $0x3] sm:$0x1]
        %v713 = vperm.slane %v712, 0
        %v718 = vunpack.c.l.b16 %v707
        %v719 = vunpack.c.l.b16 %v708
        %v720 = vunpack.c.l.b16 %v709
        %v721 = vunpack.c.l.b16 %v710
        %v722 = vpack.c.b16 %v719, %v718
        %v723 = vpack.c.b16 %v721, %v720
        %v727 = vsel %vm410, %v711, 0
        %729 = vmatpush.bf16.msra.mxu0 0
        %730 = vmatpush.bf16.msra.mxu0 0
        %731 = vmatpush.bf16.msra.mxu0 0
        %732 = vmatpush.bf16.msra.mxu0 0
        %733 = vmatpush.bf16.msra.mxu0 0
        %734 = vmatpush.bf16.msra.mxu0 0
        %735 = vmatpush.bf16.msra.mxu0 %v723
        %736 = vmatpush.bf16.msra.mxu0 %v722
        %737 = vmatmul.bf16.gmra.mxu0 %v727
        %v738 = vpop.f32.mrf.mxu0
        %v739 = vadd.f32 %v713, %v738
        %v740 = vpop.f32.mrf.mxu0
        %741 = vdwg.mxu0
        %v742 = vmul.f32 %v739, %v739
        %v743 = vsel %vm410, %v742, 0.0
        %744 = vadd.xlane.f32.xlu0 %v743
        %v745 = vpop.xlane.xlu0 %744
        %v746 = vmax.f32 %v745, 1e-24
        %v747 = vrsqrt.pop %v746
        %v748 = vmul.f32 %v747, %v746
        %v749 = vmul.f32 %v748, %v747
        %v750 = vmul.f32 0.5, %v749
        %v751 = vsub.f32 1.5, %v750
        %v752 = vmul.f32 %v747, %v751
        %vm753 = vweird.f32 %v746
        %vm754 = vweird.f32 %v747
        %vm755 = vmor %vm753, %vm754
        %v756 = vsel %vm755, %v747, %v752
        %v757 = vmul.f32 %v739, %v756
        %758 = vst.msk [vmem:[%s339] sm:$0xff] %vm410, %v757
      $region64: #{transformer_projection.1} parent=55 // pred_fallthru
        _
      %p759 = scmp.lt.s32.totalorder %s24, 0
      %s760 = scalar_select %p759, %s24, 0
      %s761 = smul.addr %s760, 8
      %s762 = scalar_lea.vmem %s9, %s761
      // Predicated region
      $region65: #{transformer_projection.1} parent=55 // pred_check
        %p763 = pneg %p244
      $region66: #{transformer_projection.1} parent=55 // pred_check_branch
        %765 = sbr.rel (%p763) target = $region68
      $region67: #{transformer_projection.1} parent=55 // pred_region
        _
      $region68: #{transformer_projection.1} parent=55 // pred_fallthru
        _
      // Predicated region
      $region69: #{transformer_projection.1} parent=55 // pred_check
        %p766 = pneg %p244
      $region70: #{transformer_projection.1} parent=55 // pred_check_branch
        %768 = sbr.rel (%p766) target = $region72
      $region71: #{transformer_projection.1} parent=55 // pred_region
        %p769 = scmp.lt.s32.totalorder %s24, 0
        %s770 = scalar_select %p769, %s24, 0
        %s771 = smul.addr %s770, 8
        %s772 = scalar_lea.vmem %s9, %s771
      $region72: #{transformer_projection.1} parent=55 // pred_fallthru
        _
    $region56: #{transformer_projection.1} parent=5 // pred_fallthru
      _
    %p773 = scmp.le.s32.totalorder 2, %s15
    // Predicated region
    $region73: #{transformer_projection.1} parent=5 // pred_check
      %p774 = pneg %p773
    $region74: #{transformer_projection.1} parent=5 // pred_check_branch
      %776 = sbr.rel (%p774) target = $region76
    $region75: #{transformer_projection.1} parent=5 // pred_region
      %s777 = ssub.s32 %s15, 2
    $region76: #{transformer_projection.1} parent=5 // pred_fallthru
      _
  $region6: #{transformer_projection.1} parent=0 // loop_footer
    %s19 = sadd.s32 1, %s15
  $region7: #{transformer_projection.1} parent=0 // loop_footer_branch
    %14 = sbr.rel target = $region3
  $region8: #{transformer_projection.1} parent=0 // loop_exit
    _

</llo_original>
